<compile_context>
chip_gen: v7x
topology: tpu7x:2x2x1
jax: 0.10.0
libtpu: 0.0.40
codegen_flags: <defaults>
</compile_context>

<pallas_src>
import jax
import jax.numpy as jnp
from jax.experimental import pallas as pl
from jax.experimental.pallas import tpu as pltpu

PAD = 128  # lane width for the hidden dims (16 -> 128, 8 -> 128)


def _mlp_kernel(x_ref, w1_ref, b1_ref, w2_ref, b2_ref, w3_ref, b3_ref, o_ref):
    # Fused Linear -> ReLU -> Linear -> ReLU -> Linear, all in VMEM.
    x = x_ref[...]                                                     # (tb, F) unpadded
    h1 = jnp.dot(x, w1_ref[...], preferred_element_type=jnp.float32) + b1_ref[...]
    h1 = jnp.maximum(h1, 0.0)                                          # (tb, 128); lanes >=16 are 0
    h2 = jnp.dot(h1, w2_ref[...], preferred_element_type=jnp.float32) + b2_ref[...]
    h2 = jnp.maximum(h2, 0.0)                                          # (tb, 128); lanes >=8 are 0
    # output_size == 1: lane-reduce against the (1, 128) weight row instead of an N=1 matmul.
    o_ref[...] = jnp.sum(h2 * w3_ref[...], axis=-1, keepdims=True) + b3_ref[...]


def _pad_to(a, shape):
    out = jnp.zeros(shape, dtype=jnp.float32)
    return out.at[tuple(slice(0, s) for s in a.shape)].set(a)


def prepare_params(params):
    """Pad parameters once (outside the per-call forward path)."""
    (w1, b1), (w2, b2), (w3, b3) = params
    fin = w1.shape[0]
    w1_p = _pad_to(w1, (fin, PAD))                # (F, 16)  -> (F, 128)   contraction dim unpadded
    b1_p = _pad_to(b1[None, :], (1, PAD))         # (16,)    -> (1, 128)
    w2_p = _pad_to(w2, (PAD, PAD))                # (16, 8)  -> (128, 128)
    b2_p = _pad_to(b2[None, :], (1, PAD))         # (8,)     -> (1, 128)
    w3_p = _pad_to(w3[:, 0][None, :], (1, PAD))   # (8, 1)   -> row vector (1, 128)
    b3_p = jnp.asarray(b3, jnp.float32).reshape(1, 1)
    return (w1_p, b1_p, w2_p, b2_p, w3_p, b3_p)


def _choose_tile(B, tile_b):
    """Pick a batch tile that satisfies the (8,128) rule and minimises grid steps."""
    if B <= tile_b:
        return B, 1, B                    # single block covering the full batch dim
    tb = max(8, (tile_b // 8) * 8)        # multi-tile: sublane-aligned tile
    n_tiles = pl.cdiv(B, tb)
    return tb, n_tiles, n_tiles * tb


def regressor_forward(x, padded_params, *, tile_b=1024):
    """x: (B, input_size) f32. padded_params from prepare_params(). Returns (B, 1) f32."""
    w1_p, b1_p, w2_p, b2_p, w3_p, b3_p = padded_params
    B, F = x.shape

    tb, n_tiles, Bp = _choose_tile(B, tile_b)
    if Bp != B:  # pad the batch once so every block is full; sliced off at the end
        x = jnp.concatenate([x, jnp.zeros((Bp - B, F), x.dtype)], axis=0)

    weight_full = lambda shape: pl.BlockSpec(shape, lambda i: (0, 0))

    cost = pl.CostEstimate(
        flops=2 * Bp * (F * 16 + 16 * 8 + 8),
        transcendentals=0,
        bytes_accessed=Bp * F * 4 + Bp * 4
        + 4 * (F * PAD + PAD * PAD + PAD + 2 * PAD + 1),
    )

    out = pl.pallas_call(
        _mlp_kernel,
        out_shape=jax.ShapeDtypeStruct((Bp, 1), jnp.float32),
        grid_spec=pltpu.PrefetchScalarGridSpec(
            num_scalar_prefetch=0,
            grid=(n_tiles,),
            in_specs=[
                pl.BlockSpec((tb, F), lambda i: (i, 0)),              # x tile, unpadded last dim
                weight_full((F, PAD)),   weight_full((1, PAD)),       # layer 1
                weight_full((PAD, PAD)), weight_full((1, PAD)),       # layer 2
                weight_full((1, PAD)),   weight_full((1, 1)),         # layer 3 (row vec + scalar bias)
            ],
            out_specs=pl.BlockSpec((tb, 1), lambda i: (i, 0)),
        ),
        compiler_params=pltpu.CompilerParams(
            dimension_semantics=("parallel",),   # lets v7x split batch tiles across its 2 TCs
        ),
        cost_estimate=cost,
    )(x, w1_p, b1_p, w2_p, b2_p, w3_p, b3_p)

    return out[:B] if Bp != B else out


def init_params(key, input_size):
    """Deterministic init mimicking torch.nn.Linear default U(-1/sqrt(fan_in), 1/sqrt(fan_in))."""
    sizes = [(input_size, 16), (16, 8), (8, 1)]
    params = []
    for fan_in, fan_out in sizes:
        key, kw, kb = jax.random.split(key, 3)
        bound = 1.0 / jnp.sqrt(jnp.float32(fan_in))
        w = jax.random.uniform(kw, (fan_in, fan_out), jnp.float32, -bound, bound)
        b = jax.random.uniform(kb, (fan_out,), jnp.float32, -bound, bound)
        params.append((w, b))
    return params


def _reference_forward(x, params):
    (w1, b1), (w2, b2), (w3, b3) = params
    h = jnp.maximum(x @ w1 + b1, 0.0)
    h = jnp.maximum(h @ w2 + b2, 0.0)
    return h @ w3 + b3


if __name__ == "__main__":
    # TODO(synk): the pandas/sklearn _preprocessor (NaN fill, min-max scaling, one-hot) has
    # no Pallas equivalent; the kernel starts from the already-preprocessed (B, 13) f32 input.
    key = jax.random.PRNGKey(0)
    batch = 16
    input_size = 13  # 8 numeric + 5 one-hot categorical cols after _preprocessor

    key, kx = jax.random.split(key)
    x = jax.random.uniform(kx, (batch, input_size), jnp.float32)  # preproc values are in [0,1]
    params = init_params(key, input_size)
    padded = prepare_params(params)  # padded once, reused for every forward call

    out = regressor_forward(x, padded)
    out = jax.block_until_ready(out)
    ref = _reference_forward(x, params)
    assert out.shape == (batch, 1)
    assert jnp.allclose(out, ref, atol=1e-5, rtol=1e-5)

    # Exercise the non-multiple-batch (tail-padding) multi-tile path as well.
    key, kx2 = jax.random.split(key)
    x2 = jax.random.uniform(kx2, (20, input_size), jnp.float32)
    out2 = jax.block_until_ready(regressor_forward(x2, padded, tile_b=8))
    ref2 = _reference_forward(x2, params)
    assert out2.shape == (20, 1)
    assert jnp.allclose(out2, ref2, atol=1e-5, rtol=1e-5)

    # Exercise a larger batch that needs several sublane-aligned tiles (tile rounding path).
    key, kx3 = jax.random.split(key)
    x3 = jax.random.uniform(kx3, (300, input_size), jnp.float32)
    out3 = jax.block_until_ready(regressor_forward(x3, padded, tile_b=100))
    ref3 = _reference_forward(x3, params)
    assert out3.shape == (300, 1)
    assert jnp.allclose(out3, ref3, atol=1e-5, rtol=1e-5)

    print("KERNEL_OK")
</pallas_src>

<mosaic_0001>
module attributes {stable_mosaic.version = 11 : i64} {
  func.func @_mlp_kernel(%arg0: i32, %arg1: memref<16x13xf32, #tpu.memory_space<vmem>>, %arg2: memref<13x128xf32, #tpu.memory_space<vmem>>, %arg3: memref<1x128xf32, #tpu.memory_space<vmem>>, %arg4: memref<128x128xf32, #tpu.memory_space<vmem>>, %arg5: memref<1x128xf32, #tpu.memory_space<vmem>>, %arg6: memref<1x128xf32, #tpu.memory_space<vmem>>, %arg7: memref<1x1xf32, #tpu.memory_space<vmem>>, %arg8: memref<16x1xf32, #tpu.memory_space<vmem>>) attributes {dimension_semantics = [#tpu.dimension_semantics<parallel>], iteration_bounds = array<i64: 1>, scalar_prefetch = 0 : i64, scratch_operands = 0 : i64, tpu.core_type = #tpu.core_type<tc>, window_params = [{transform_indices = @transform_0, window_bounds = array<i64: 16, 13>}, {pipeline_mode = #tpu.pipeline_mode<synchronous>, transform_indices = @transform_1, window_bounds = array<i64: 13, 128>}, {pipeline_mode = #tpu.pipeline_mode<synchronous>, transform_indices = @transform_2, window_bounds = array<i64: 1, 128>}, {pipeline_mode = #tpu.pipeline_mode<synchronous>, transform_indices = @transform_3, window_bounds = array<i64: 128, 128>}, {pipeline_mode = #tpu.pipeline_mode<synchronous>, transform_indices = @transform_4, window_bounds = array<i64: 1, 128>}, {pipeline_mode = #tpu.pipeline_mode<synchronous>, transform_indices = @transform_5, window_bounds = array<i64: 1, 128>}, {pipeline_mode = #tpu.pipeline_mode<synchronous>, transform_indices = @transform_6, window_bounds = array<i64: 1, 1>}, {transform_indices = @transform_7, window_bounds = array<i64: 16, 1>}]} {
    %c0 = arith.constant 0 : index
    %c0_0 = arith.constant 0 : index
    %0 = vector.load %arg1[%c0, %c0_0] : memref<16x13xf32, #tpu.memory_space<vmem>>, vector<16x13xf32>
    %c0_1 = arith.constant 0 : index
    %c0_2 = arith.constant 0 : index
    %1 = vector.load %arg2[%c0_1, %c0_2] : memref<13x128xf32, #tpu.memory_space<vmem>>, vector<13x128xf32>
    %cst = arith.constant dense<0.000000e+00> : vector<16x128xf32>
    %2 = tpu.matmul %0, %1, %cst {dimension_numbers = #tpu.dot_dimension_numbers<[1], [0], [0], [1], [0, 0, 1, 1], [], []>} : vector<16x13xf32>, vector<13x128xf32>, vector<16x128xf32> -> vector<16x128xf32>
    %c0_3 = arith.constant 0 : index
    %c0_4 = arith.constant 0 : index
    %3 = vector.load %arg3[%c0_3, %c0_4] : memref<1x128xf32, #tpu.memory_space<vmem>>, vector<1x128xf32>
    %4 = vector.broadcast %3 : vector<1x128xf32> to vector<16x128xf32>
    %5 = arith.addf %2, %4 : vector<16x128xf32>
    %cst_5 = arith.constant 0.000000e+00 : f32
    %6 = vector.broadcast %cst_5 : f32 to vector<16x128xf32>
    %7 = arith.maximumf %5, %6 : vector<16x128xf32>
    %c0_6 = arith.constant 0 : index
    %c0_7 = arith.constant 0 : index
    %8 = vector.load %arg4[%c0_6, %c0_7] : memref<128x128xf32, #tpu.memory_space<vmem>>, vector<128x128xf32>
    %cst_8 = arith.constant dense<0.000000e+00> : vector<16x128xf32>
    %9 = tpu.matmul %7, %8, %cst_8 {dimension_numbers = #tpu.dot_dimension_numbers<[1], [0], [0], [1], [0, 0, 1, 1], [], []>} : vector<16x128xf32>, vector<128x128xf32>, vector<16x128xf32> -> vector<16x128xf32>
    %c0_9 = arith.constant 0 : index
    %c0_10 = arith.constant 0 : index
    %10 = vector.load %arg5[%c0_9, %c0_10] : memref<1x128xf32, #tpu.memory_space<vmem>>, vector<1x128xf32>
    %11 = vector.broadcast %10 : vector<1x128xf32> to vector<16x128xf32>
    %12 = arith.addf %9, %11 : vector<16x128xf32>
    %cst_11 = arith.constant 0.000000e+00 : f32
    %13 = vector.broadcast %cst_11 : f32 to vector<16x128xf32>
    %14 = arith.maximumf %12, %13 : vector<16x128xf32>
    %c0_12 = arith.constant 0 : index
    %c0_13 = arith.constant 0 : index
    %15 = vector.load %arg6[%c0_12, %c0_13] : memref<1x128xf32, #tpu.memory_space<vmem>>, vector<1x128xf32>
    %16 = vector.broadcast %15 : vector<1x128xf32> to vector<16x128xf32>
    %17 = arith.mulf %14, %16 : vector<16x128xf32>
    %cst_14 = arith.constant dense<0.000000e+00> : vector<16xf32>
    %18 = vector.multi_reduction <add>, %17, %cst_14 [1] : vector<16x128xf32> to vector<16xf32>
    %19 = vector.shape_cast %18 : vector<16xf32> to vector<16x1xf32>
    %c0_15 = arith.constant 0 : index
    %c0_16 = arith.constant 0 : index
    %20 = vector.load %arg7[%c0_15, %c0_16] : memref<1x1xf32, #tpu.memory_space<vmem>>, vector<1x1xf32>
    %21 = vector.broadcast %20 : vector<1x1xf32> to vector<16x1xf32>
    %22 = arith.addf %19, %21 : vector<16x1xf32>
    %c0_17 = arith.constant 0 : index
    %c0_18 = arith.constant 0 : index
    %23 = vector.load %arg8[%c0_17, %c0_18] : memref<16x1xf32, #tpu.memory_space<vmem>>, vector<16x1xf32>
    tpu.vector_store %arg8[%c0_17, %c0_18], %22 {strides = array<i32>} : memref<16x1xf32, #tpu.memory_space<vmem>>, vector<16x1xf32>,
    return
  }
  func.func @transform_0(%arg0: i32) -> (i32, i32) {
    %c0_i32 = arith.constant 0 : i32
    %c0_i32_0 = arith.constant 0 : i32
    return %arg0, %c0_i32 : i32, i32
  }
  func.func @transform_1(%arg0: i32) -> (i32, i32) {
    %c0_i32 = arith.constant 0 : i32
    %c0_i32_0 = arith.constant 0 : i32
    %c0_i32_1 = arith.constant 0 : i32
    return %c0_i32, %c0_i32_0 : i32, i32
  }
  func.func @transform_2(%arg0: i32) -> (i32, i32) {
    %c0_i32 = arith.constant 0 : i32
    %c0_i32_0 = arith.constant 0 : i32
    %c0_i32_1 = arith.constant 0 : i32
    return %c0_i32, %c0_i32_0 : i32, i32
  }
  func.func @transform_3(%arg0: i32) -> (i32, i32) {
    %c0_i32 = arith.constant 0 : i32
    %c0_i32_0 = arith.constant 0 : i32
    %c0_i32_1 = arith.constant 0 : i32
    return %c0_i32, %c0_i32_0 : i32, i32
  }
  func.func @transform_4(%arg0: i32) -> (i32, i32) {
    %c0_i32 = arith.constant 0 : i32
    %c0_i32_0 = arith.constant 0 : i32
    %c0_i32_1 = arith.constant 0 : i32
    return %c0_i32, %c0_i32_0 : i32, i32
  }
  func.func @transform_5(%arg0: i32) -> (i32, i32) {
    %c0_i32 = arith.constant 0 : i32
    %c0_i32_0 = arith.constant 0 : i32
    %c0_i32_1 = arith.constant 0 : i32
    return %c0_i32, %c0_i32_0 : i32, i32
  }
  func.func @transform_6(%arg0: i32) -> (i32, i32) {
    %c0_i32 = arith.constant 0 : i32
    %c0_i32_0 = arith.constant 0 : i32
    %c0_i32_1 = arith.constant 0 : i32
    return %c0_i32, %c0_i32_0 : i32, i32
  }
  func.func @transform_7(%arg0: i32) -> (i32, i32) {
    %c0_i32 = arith.constant 0 : i32
    %c0_i32_0 = arith.constant 0 : i32
    return %arg0, %c0_i32 : i32, i32
  }
}

</mosaic_0001>

<llo_original>
// kernel: tpu_custom_call.1
$region0: #{tpu_custom_call.1}
  #allocation0 [shape = 'u32[]', space=smem, size = 0x4, offset = 0x4, fixed_abs, tag = 'smem constant byte address 0x4 - core index']
  #allocation1 [shape = 'u32[144,128]{1,0:T(1,128)}', space=vmem, size = 0x12000, scoped, tag = 'internal scratch']
  #allocation2 [shape = 'f32[1,1]{1,0:T(1,128)S(1)}', space=vmem, size = 0x200, scoped, tag = 'scoped memory for tpu_custom_call.1']
  %s0 = inlined_call_operand.hbm [shape: f32[16,13], index: 0, kind: input, shape index: {}]
  %s1 = inlined_call_operand.hbm [shape: f32[13,128], index: 1, kind: input, shape index: {}]
  %s2 = inlined_call_operand.vmem [shape: f32[1,128], index: 2, kind: input, shape index: {}]
  %s3 = inlined_call_operand.hbm [shape: f32[128,128], index: 3, kind: input, shape index: {}]
  %s4 = inlined_call_operand.vmem [shape: f32[1,128], index: 4, kind: input, shape index: {}]
  %s5 = inlined_call_operand.vmem [shape: f32[1,128], index: 5, kind: input, shape index: {}]
  %s6 = inlined_call_operand.<no memory space> [shape: f32[1,1], index: 6, kind: input, shape index: {}]
  %s7 = inlined_call_operand.vmem [shape: f32[16,1], index: 7, kind: output, shape index: {}]
  %s8 = sld [smem:[#allocation0]]
  $region50: #{tpu_custom_call.1} parent=0
    _
  %s10 = ssub.s32 1, %s8
  %s11 = scalar_select 0, %s10, %s8
  %v12 = vstv %s6
  %13 = vst [vmem:[#allocation2] sm:$0x1] %v12
  $region1: #{tpu_custom_call.1} parent=0
    #allocation3 [shape = 'u8[8192]{0}', space=vmem, size = 0x2000, scoped, tag = 'input window, operand 0, single buffered']
    #allocation4 [shape = 's32[1]{0}', space=sflag, size = 0x4, scoped, tag = 'scoped memory for tpu_custom_call.1']
    #allocation5 [shape = 'u8[8192]{0}', space=vmem, size = 0x2000, scoped, tag = 'input window, operand 1, single buffered']
    #allocation6 [shape = 's32[1]{0}', space=sflag, size = 0x4, scoped, tag = 'scoped memory for tpu_custom_call.1']
    #allocation7 [shape = 'u8[65536]{0}', space=vmem, size = 0x10000, scoped, tag = 'input window, operand 3, single buffered']
    %14 = vsyncpa [#allocation4], 0
    %15 = vsyncpa [#allocation6], 0
    // Predicated region
    $region2: #{tpu_custom_call.1} parent=1 // pred_check
      _
    $region3: #{tpu_custom_call.1} parent=1 // pred_check_branch
      %17 = sbr.rel (0) target = $region5
    $region4: #{tpu_custom_call.1} parent=1 // pred_region
      %s19 = ssub.s32 256, 256
      %20 = vsyncadd [#allocation4], %s19
      %s21 = sshll.u32 [#allocation3], 4
      %s22 = int_to_ptr.vmem [resolvable:$true] %s21
      %27 = dma.hbm_to_vmem [thread:$0]  %s0, 256, %s22, [#allocation4], 128, 128, 8
    $region5: #{tpu_custom_call.1} parent=1 // pred_fallthru
      _
    // Predicated region
    $region6: #{tpu_custom_call.1} parent=1 // pred_check
      _
    $region7: #{tpu_custom_call.1} parent=1 // pred_check_branch
      %29 = sbr.rel (0) target = $region9
    $region8: #{tpu_custom_call.1} parent=1 // pred_region
      %s31 = ssub.s32 256, 256
      %32 = vsyncadd [#allocation6], %s31
      %s33 = sshll.u32 [#allocation5], 4
      %s34 = int_to_ptr.vmem [resolvable:$true] %s33
      %39 = dma.hbm_to_vmem [thread:$0]  %s1, 256, %s34, [#allocation6], 128, 128, 8
    $region9: #{tpu_custom_call.1} parent=1 // pred_fallthru
      _
    // Predicated region
    $region10: #{tpu_custom_call.1} parent=1 // pred_check
      _
    $region11: #{tpu_custom_call.1} parent=1 // pred_check_branch
      %41 = sbr.rel (0) target = $region13
    $region12: #{tpu_custom_call.1} parent=1 // pred_region
      _
    $region13: #{tpu_custom_call.1} parent=1 // pred_fallthru
      _
    // Predicated region
    $region14: #{tpu_custom_call.1} parent=1 // pred_check
      _
    $region15: #{tpu_custom_call.1} parent=1 // pred_check_branch
      %43 = sbr.rel (0) target = $region17
    $region16: #{tpu_custom_call.1} parent=1 // pred_region
      %s45 = ssub.s32 2048, 2048
      %46 = vsyncadd [#allocation6], %s45
      %s47 = sshll.u32 [#allocation7], 4
      %s48 = int_to_ptr.vmem [resolvable:$true] %s47
      %53 = dma.hbm_to_vmem [thread:$0]  %s3, 2048, %s48, [#allocation6], 128, 128, 8
    $region17: #{tpu_custom_call.1} parent=1 // pred_fallthru
      _
    // Predicated region
    $region18: #{tpu_custom_call.1} parent=1 // pred_check
      _
    $region19: #{tpu_custom_call.1} parent=1 // pred_check_branch
      %55 = sbr.rel (0) target = $region21
    $region20: #{tpu_custom_call.1} parent=1 // pred_region
      _
    $region21: #{tpu_custom_call.1} parent=1 // pred_fallthru
      _
    // Predicated region
    $region22: #{tpu_custom_call.1} parent=1 // pred_check
      _
    $region23: #{tpu_custom_call.1} parent=1 // pred_check_branch
      %57 = sbr.rel (0) target = $region25
    $region24: #{tpu_custom_call.1} parent=1 // pred_region
      _
    $region25: #{tpu_custom_call.1} parent=1 // pred_fallthru
      _
    // Predicated region
    $region26: #{tpu_custom_call.1} parent=1 // pred_check
      _
    $region27: #{tpu_custom_call.1} parent=1 // pred_check_branch
      %59 = sbr.rel (0) target = $region29
    $region28: #{tpu_custom_call.1} parent=1 // pred_region
      _
    $region29: #{tpu_custom_call.1} parent=1 // pred_fallthru
      _
    // Predicated region
    $region30: #{tpu_custom_call.1} parent=1 // pred_check
      _
    $region31: #{tpu_custom_call.1} parent=1 // pred_check_branch
      %61 = sbr.rel (0) target = $region33
    $region32: #{tpu_custom_call.1} parent=1 // pred_region
      %62 = dma.done [#allocation4], 256
    $region33: #{tpu_custom_call.1} parent=1 // pred_fallthru
      _
    // Predicated region
    $region34: #{tpu_custom_call.1} parent=1 // pred_check
      _
    $region35: #{tpu_custom_call.1} parent=1 // pred_check_branch
      %64 = sbr.rel (0) target = $region37
    $region36: #{tpu_custom_call.1} parent=1 // pred_region
      %65 = dma.done [#allocation6], 256
    $region37: #{tpu_custom_call.1} parent=1 // pred_fallthru
      _
    // Predicated region
    $region38: #{tpu_custom_call.1} parent=1 // pred_check
      _
    $region39: #{tpu_custom_call.1} parent=1 // pred_check_branch
      %67 = sbr.rel (0) target = $region41
    $region40: #{tpu_custom_call.1} parent=1 // pred_region
      %68 = dma.done [#allocation6], 2048
    $region41: #{tpu_custom_call.1} parent=1 // pred_fallthru
      _
    %v69 = vld [vmem:[#allocation3] sm:$0xff]
    %v70 = vld [vmem:[#allocation3 + $0x8] sm:$0xff]
    %v71 = vld [vmem:[#allocation5] sm:$0xff]
    %v72 = vld [vmem:[#allocation5 + $0x8] sm:$0x1f]
    %v73 = vld [vmem:[%s2] sm:$0x1]
    %v75 = vlaneseq
    %v76 = vshrl.u32 %v75, 7
    %v77 = vsub.s32 0, %v76
    %v78 = vrot.slane %v73, %v77
    %vm80 = vcmask 105472
    %v82 = vsel %vm80, %v69, 0
    %v85 = vsel %vm80, %v70, 0
    %vm87 = vcmask 1044480
    %v89 = vsel %vm87, %v72, 0
    %91 = vmatprep.subr.mxu0 0.0
    %92 = vmatpush1.msra.mxu0 %v71
    %93 = vmatprep.subr.mxu0 0.0
    %94 = vmatpush1.msra.mxu0 %v89
    %95 = vmatprep.subr.mxu0 0.0
    %96 = vmatpush1.msra.mxu0 0.0
    %97 = vmatprep.subr.mxu0 0.0
    %98 = vmatpush1.msra.mxu0 0.0
    %99 = vmatprep.subr.mxu0 0.0
    %100 = vmatpush1.msra.mxu0 0.0
    %101 = vmatprep.subr.mxu0 0.0
    %102 = vmatpush1.msra.mxu0 0.0
    %103 = vmatprep.subr.mxu0 0.0
    %104 = vmatpush1.msra.mxu0 0.0
    %105 = vmatprep.subr.mxu0 0.0
    %106 = vmatpush1.msra.mxu0 0.0
    %107 = vmatprep.subr.mxu0 0.0
    %108 = vmatpush1.msra.mxu0 0.0
    %109 = vmatprep.subr.mxu0 0.0
    %110 = vmatpush1.msra.mxu0 0.0
    %111 = vmatprep.subr.mxu0 0.0
    %112 = vmatpush1.msra.mxu0 0.0
    %113 = vmatprep.subr.mxu0 0.0
    %114 = vmatpush1.msra.mxu0 0.0
    %115 = vmatprep.subr.mxu0 0.0
    %116 = vmatpush1.msra.mxu0 0.0
    %117 = vmatprep.subr.mxu0 0.0
    %118 = vmatpush1.msra.mxu0 0.0
    %119 = vmatprep.subr.mxu0 0.0
    %120 = vmatpush1.msra.mxu0 0.0
    %121 = vmatprep.subr.mxu0 0.0
    %122 = vmatpush1.msra.mxu0 0.0
    %123 = vmatprep.subr.mxu0 0.0
    %124 = vmatpush1.msra.mxu0 0.0
    %125 = vmatprep.subr.mxu0 0.0
    %126 = vmatpush1.msra.mxu0 0.0
    %127 = vmatprep.subr.mxu0 0.0
    %128 = vmatpush1.msra.mxu0 0.0
    %129 = vmatprep.subr.mxu0 0.0
    %130 = vmatpush1.msra.mxu0 0.0
    %131 = vmatprep.subr.mxu0 0.0
    %132 = vmatpush1.msra.mxu0 0.0
    %133 = vmatprep.subr.mxu0 0.0
    %134 = vmatpush1.msra.mxu0 0.0
    %135 = vmatprep.subr.mxu0 0.0
    %136 = vmatpush1.msra.mxu0 0.0
    %137 = vmatprep.subr.mxu0 0.0
    %138 = vmatpush1.msra.mxu0 0.0
    %139 = vmatprep.subr.mxu0 0.0
    %140 = vmatpush1.msra.mxu0 0.0
    %141 = vmatprep.subr.mxu0 0.0
    %142 = vmatpush1.msra.mxu0 0.0
    %143 = vmatprep.subr.mxu0 0.0
    %144 = vmatpush1.msra.mxu0 0.0
    %145 = vmatprep.subr.mxu0 0.0
    %146 = vmatpush1.msra.mxu0 0.0
    %147 = vmatprep.subr.mxu0 0.0
    %148 = vmatpush1.msra.mxu0 0.0
    %149 = vmatprep.subr.mxu0 0.0
    %150 = vmatpush1.msra.mxu0 0.0
    %151 = vmatprep.subr.mxu0 0.0
    %152 = vmatpush1.msra.mxu0 0.0
    %153 = vmatprep.subr.mxu0 0.0
    %154 = vmatpush1.msra.mxu0 0.0
    %155 = vmatprep.mubr.f32.mxu0 0.0
    %156 = vmatmul.mubr.f32.gmra.mrb[0].mxu0 %v82
    %v157 = vpop.f32.mrb[0].mxu0
    %v158 = vadd.f32 %v78, %v157
    %v159 = vpop.f32.mrb[0].mxu0
    %160 = vmatprep.mubr.f32.mxu0 0.0
    %161 = vmatmul.mubr.f32.gmra.mrb[0].mxu0 %v85
    %v162 = vpop.f32.mrb[0].mxu0
    %v163 = vadd.f32 %v78, %v162
    %v164 = vpop.f32.mrb[0].mxu0
    %165 = vdwg.mxu0
    %v166 = vmax.f32 %v158, 0.0
    %v167 = vmax.f32 %v163, 0.0
    %v168 = vld [vmem:[#allocation7] sm:$0xff]
    %v169 = vld [vmem:[#allocation7 + $0x8] sm:$0xff]
    %v170 = vld [vmem:[#allocation7 + $0x10] sm:$0xff]
    %v171 = vld [vmem:[#allocation7 + $0x18] sm:$0xff]
    %v172 = vld [vmem:[#allocation7 + $0x20] sm:$0xff]
    %v173 = vld [vmem:[#allocation7 + $0x28] sm:$0xff]
    %v174 = vld [vmem:[#allocation7 + $0x30] sm:$0xff]
    %v175 = vld [vmem:[#allocation7 + $0x38] sm:$0xff]
    %v176 = vld [vmem:[#allocation7 + $0x40] sm:$0xff]
    %v177 = vld [vmem:[#allocation7 + $0x48] sm:$0xff]
    %v178 = vld [vmem:[#allocation7 + $0x50] sm:$0xff]
    %v179 = vld [vmem:[#allocation7 + $0x58] sm:$0xff]
    %v180 = vld [vmem:[#allocation7 + $0x60] sm:$0xff]
    %v181 = vld [vmem:[#allocation7 + $0x68] sm:$0xff]
    %v182 = vld [vmem:[#allocation7 + $0x70] sm:$0xff]
    %v183 = vld [vmem:[#allocation7 + $0x78] sm:$0xff]
    %v184 = vld [vmem:[%s4] sm:$0x1]
    %v186 = vlaneseq
    %v187 = vshrl.u32 %v186, 7
    %v188 = vsub.s32 0, %v187
    %v189 = vrot.slane %v184, %v188
    %191 = vmatprep.subr.mxu0 0.0
    %192 = vmatpush1.msra.mxu0 %v168
    %193 = vmatprep.subr.mxu0 0.0
    %194 = vmatpush1.msra.mxu0 %v169
    %195 = vmatprep.subr.mxu0 0.0
    %196 = vmatpush1.msra.mxu0 %v170
    %197 = vmatprep.subr.mxu0 0.0
    %198 = vmatpush1.msra.mxu0 %v171
    %199 = vmatprep.subr.mxu0 0.0
    %200 = vmatpush1.msra.mxu0 %v172
    %201 = vmatprep.subr.mxu0 0.0
    %202 = vmatpush1.msra.mxu0 %v173
    %203 = vmatprep.subr.mxu0 0.0
    %204 = vmatpush1.msra.mxu0 %v174
    %205 = vmatprep.subr.mxu0 0.0
    %206 = vmatpush1.msra.mxu0 %v175
    %207 = vmatprep.subr.mxu0 0.0
    %208 = vmatpush1.msra.mxu0 %v176
    %209 = vmatprep.subr.mxu0 0.0
    %210 = vmatpush1.msra.mxu0 %v177
    %211 = vmatprep.subr.mxu0 0.0
    %212 = vmatpush1.msra.mxu0 %v178
    %213 = vmatprep.subr.mxu0 0.0
    %214 = vmatpush1.msra.mxu0 %v179
    %215 = vmatprep.subr.mxu0 0.0
    %216 = vmatpush1.msra.mxu0 %v180
    %217 = vmatprep.subr.mxu0 0.0
    %218 = vmatpush1.msra.mxu0 %v181
    %219 = vmatprep.subr.mxu0 0.0
    %220 = vmatpush1.msra.mxu0 %v182
    %221 = vmatprep.subr.mxu0 0.0
    %222 = vmatpush1.msra.mxu0 %v183
    %223 = vmatprep.subr.mxu0 0.0
    %224 = vmatpush1.msra.mxu0 0.0
    %225 = vmatprep.subr.mxu0 0.0
    %226 = vmatpush1.msra.mxu0 0.0
    %227 = vmatprep.subr.mxu0 0.0
    %228 = vmatpush1.msra.mxu0 0.0
    %229 = vmatprep.subr.mxu0 0.0
    %230 = vmatpush1.msra.mxu0 0.0
    %231 = vmatprep.subr.mxu0 0.0
    %232 = vmatpush1.msra.mxu0 0.0
    %233 = vmatprep.subr.mxu0 0.0
    %234 = vmatpush1.msra.mxu0 0.0
    %235 = vmatprep.subr.mxu0 0.0
    %236 = vmatpush1.msra.mxu0 0.0
    %237 = vmatprep.subr.mxu0 0.0
    %238 = vmatpush1.msra.mxu0 0.0
    %239 = vmatprep.subr.mxu0 0.0
    %240 = vmatpush1.msra.mxu0 0.0
    %241 = vmatprep.subr.mxu0 0.0
    %242 = vmatpush1.msra.mxu0 0.0
    %243 = vmatprep.subr.mxu0 0.0
    %244 = vmatpush1.msra.mxu0 0.0
    %245 = vmatprep.subr.mxu0 0.0
    %246 = vmatpush1.msra.mxu0 0.0
    %247 = vmatprep.subr.mxu0 0.0
    %248 = vmatpush1.msra.mxu0 0.0
    %249 = vmatprep.subr.mxu0 0.0
    %250 = vmatpush1.msra.mxu0 0.0
    %251 = vmatprep.subr.mxu0 0.0
    %252 = vmatpush1.msra.mxu0 0.0
    %253 = vmatprep.subr.mxu0 0.0
    %254 = vmatpush1.msra.mxu0 0.0
    %255 = vmatprep.mubr.f32.mxu0 0.0
    %256 = vmatmul.mubr.f32.gmra.mrb[0].mxu0 %v166
    %v257 = vpop.f32.mrb[0].mxu0
    %v258 = vadd.f32 %v189, %v257
    %v259 = vpop.f32.mrb[0].mxu0
    %260 = vmatprep.mubr.f32.mxu0 0.0
    %261 = vmatmul.mubr.f32.gmra.mrb[0].mxu0 %v167
    %v262 = vpop.f32.mrb[0].mxu0
    %v263 = vadd.f32 %v189, %v262
    %v264 = vpop.f32.mrb[0].mxu0
    %265 = vdwg.mxu0
    %v266 = vmax.f32 %v258, 0.0
    %v267 = vmax.f32 %v263, 0.0
    %v268 = vld [vmem:[%s5] sm:$0x1]
    %v270 = vlaneseq
    %v271 = vshrl.u32 %v270, 7
    %v272 = vsub.s32 0, %v271
    %v273 = vrot.slane %v268, %v272
    %v275 = vmul.f32 %v266, %v273
    %v276 = vmul.f32 %v267, %v273
    %277 = vadd.xlane.f32.xlu0 %v275
    %v278 = vpop.xlane.xlu0 %277
    %279 = vadd.xlane.f32.xlu0 %v276
    %v280 = vpop.xlane.xlu0 %279
    %v281 = vld [vmem:[#allocation2] sm:$0x1]
    %v283 = vlaneseq
    %v284 = vshrl.u32 %v283, 7
    %v285 = vsub.s32 0, %v284
    %v286 = vrot.slane %v281, %v285
    %v288 = vadd.f32 %v278, %v286
    %v289 = vadd.f32 %v280, %v286
    %vm290 = vcmask 7168
    %291 = vst.msk [vmem:[%s7] sm:$0xff] %vm290, %v288
    %292 = vst.msk [vmem:[%s7 + $0x8] sm:$0xff] %vm290, %v289
    // Predicated region
    $region42: #{tpu_custom_call.1} parent=1 // pred_check
      _
    $region43: #{tpu_custom_call.1} parent=1 // pred_check_branch
      %294 = sbr.rel (0) target = $region45
    $region44: #{tpu_custom_call.1} parent=1 // pred_region
      _
    $region45: #{tpu_custom_call.1} parent=1 // pred_fallthru
      _
    // Predicated region
    $region46: #{tpu_custom_call.1} parent=1 // pred_check
      _
    $region47: #{tpu_custom_call.1} parent=1 // pred_check_branch
      %296 = sbr.rel (0) target = $region49
    $region48: #{tpu_custom_call.1} parent=1 // pred_region
      _
    $region49: #{tpu_custom_call.1} parent=1 // pred_fallthru
      _
    %297 = vsyncpa [#allocation4], 1
    %298 = vsyncpa [#allocation6], 1

</llo_original>
